<compile_context>
chip_gen: v5e
topology: v5e:2x2
jax: 0.10.0
libtpu: 0.0.40
codegen_flags: <defaults>
</compile_context>

<pallas_src>
import functools

import jax
import jax.numpy as jnp
from jax.experimental import pallas as pl
from jax.experimental.pallas import tpu as pltpu


def _ceil_div(a, b):
    return -(-a // b)


def _round_up(a, m):
    return _ceil_div(a, m) * m


# -----------------------------------------------------------------------------
# Fused path: one kernel, full H*W per block, per-row stats + apply.
# -----------------------------------------------------------------------------
def _afi_fused_kernel(g_ref, l_ref, o_ref, *, inv_n, inv_nm1):
    g = g_ref[...].astype(jnp.float32)
    l = l_ref[...].astype(jnp.float32)

    # Two-pass (centered) unbiased variance for both inputs; +1e-6 added to
    # both stds exactly as in the reference module.
    g_mean = jnp.sum(g, axis=1, keepdims=True) * inv_n
    g_c = g - g_mean
    g_std = jnp.sqrt(jnp.sum(g_c * g_c, axis=1, keepdims=True) * inv_nm1) + 1e-6

    l_mean = jnp.sum(l, axis=1, keepdims=True) * inv_n
    l_c = l - l_mean
    l_std = jnp.sqrt(jnp.sum(l_c * l_c, axis=1, keepdims=True) * inv_nm1) + 1e-6

    # Per-row scale/bias: the divide only touches (rows, 1) values; the
    # per-element work is one multiply-add.
    scale = g_std / l_std
    bias = g_mean - l_mean * scale
    o_ref[...] = (l * scale + bias).astype(o_ref.dtype)


# -----------------------------------------------------------------------------
# Split path (large H*W / tiny B*C): streamed stats pass + apply pass.
# -----------------------------------------------------------------------------
def _afi_stats_kernel(g_ref, l_ref, scale_ref, bias_ref,
                      gsum, gsq, lsum, lsq, *, hw, tile_hw, inv_n, inv_nm1):
    j = pl.program_id(1)

    @pl.when(j == 0)
    def _():
        gsum[...] = jnp.zeros_like(gsum)
        gsq[...] = jnp.zeros_like(gsq)
        lsum[...] = jnp.zeros_like(lsum)
        lsq[...] = jnp.zeros_like(lsq)

    g = g_ref[...].astype(jnp.float32)
    l = l_ref[...].astype(jnp.float32)
    if hw % tile_hw != 0:
        # Ragged last H*W block: zero out-of-range lanes so they drop out of
        # the sums (only traced when the shapes actually require it).
        lane = jax.lax.broadcasted_iota(jnp.int32, g.shape, 1) + j * tile_hw
        valid = lane < hw
        g = jnp.where(valid, g, 0.0)
        l = jnp.where(valid, l, 0.0)

    gsum[...] += jnp.sum(g, axis=1, keepdims=True)
    gsq[...] += jnp.sum(g * g, axis=1, keepdims=True)
    lsum[...] += jnp.sum(l, axis=1, keepdims=True)
    lsq[...] += jnp.sum(l * l, axis=1, keepdims=True)

    @pl.when(j == pl.num_programs(1) - 1)
    def _():
        # Streamed single-pass variance in f32 (clamped at 0).
        # TODO(synk): switch to a chunk-centered (Chan) update if very
        # large-offset feature maps need tighter precision on this path.
        g_mean = gsum[...] * inv_n
        g_var = jnp.maximum(gsq[...] - g_mean * gsum[...], 0.0) * inv_nm1
        g_std = jnp.sqrt(g_var) + 1e-6
        l_mean = lsum[...] * inv_n
        l_var = jnp.maximum(lsq[...] - l_mean * lsum[...], 0.0) * inv_nm1
        l_std = jnp.sqrt(l_var) + 1e-6
        scale = g_std / l_std
        scale_ref[...] = scale
        bias_ref[...] = g_mean - l_mean * scale


def _afi_apply_kernel(scale_ref, bias_ref, l_ref, o_ref):
    l = l_ref[...].astype(jnp.float32)
    o_ref[...] = (l * scale_ref[...] + bias_ref[...]).astype(o_ref.dtype)


# -----------------------------------------------------------------------------
# Wrapper
# -----------------------------------------------------------------------------
def adaptive_feature_integration(global_features, local_features,
                                 _vmem_budget_override=None):
    """AdaIN-style alignment of local features to global feature statistics."""
    assert global_features.shape == local_features.shape
    B, C, H, W = global_features.shape
    bc = B * C
    hw = H * W
    if hw < 2:
        raise ValueError("AdaptiveFeatureIntegration requires H*W >= 2 (unbiased std).")

    out_dtype = local_features.dtype
    itemsize = jnp.dtype(out_dtype).itemsize
    sublane = {4: 8, 2: 16, 1: 32}.get(itemsize, 8)

    inv_n = 1.0 / float(hw)
    inv_nm1 = 1.0 / (float(hw) - 1.0)

    g2d = global_features.reshape(bc, hw)
    l2d = local_features.reshape(bc, hw)

    # ---- VMEM budget (per TensorCore) ---------------------------------------
    try:
        vmem_cap = int(pltpu.get_tpu_info().vmem_capacity_bytes)
    except Exception:
        vmem_cap = 64 << 20
    # Conservative: the query may report per-chip capacity on multi-TC parts
    # (v7x: 64 MiB per TensorCore), so never budget above what the smallest
    # per-core generation guarantees.  Tile-size gains saturate at multi-MiB
    # blocks, so this costs nothing on v5e/v6e.
    budget = min(int(vmem_cap * 0.40), 24 << 20)
    if _vmem_budget_override is not None:
        budget = int(_vmem_budget_override)
    vmem_hard_cap = min(52 << 20, int(vmem_cap * 0.85))

    # Per-row working set on the fused path: 3 arrays x 2 pipeline buffers x
    # itemsize + ~4 f32 in-kernel temporaries.
    per_row_bytes = hw * (6 * itemsize + 16)
    min_rows = bc if bc <= sublane else sublane
    fused_fits = min_rows * per_row_bytes <= budget

    if fused_fits:
        # ---- fused single-kernel path ---------------------------------------
        if bc <= sublane:
            tile_rows = bc
        else:
            tile_rows = (budget // per_row_bytes // sublane) * sublane
            tile_rows = max(sublane, min(tile_rows, bc))
            steps = _ceil_div(bc, tile_rows)
            # v7x megacore: prefer an even number of row-grid steps so both
            # TensorCores get a balanced share of this streaming kernel.
            # TODO(synk): verify via profile that "parallel" shards this axis
            # across both v7x TensorCores; if not, add an explicit leading
            # grid axis of size 2.
            target = steps
            if steps == 1 and bc >= 2 * sublane:
                target = 2
            elif steps > 1 and steps % 2 == 1 and bc > steps * sublane:
                target = steps + 1
            if target != steps:
                cand = min(_round_up(_ceil_div(bc, target), sublane), bc)
                if cand >= sublane and _ceil_div(bc, cand) == target:
                    tile_rows = cand

        pipelined = 6 * tile_rows * hw * itemsize
        temps = 4 * tile_rows * hw * 4
        vmem_limit = min(max(32 << 20, pipelined + temps + (4 << 20)), vmem_hard_cap)

        out2d = pl.pallas_call(
            functools.partial(_afi_fused_kernel, inv_n=inv_n, inv_nm1=inv_nm1),
            out_shape=jax.ShapeDtypeStruct((bc, hw), out_dtype),
            grid_spec=pltpu.PrefetchScalarGridSpec(
                num_scalar_prefetch=0,
                # Ragged last row block is fine: stats are per-row and writes
                # to out-of-range rows are masked.
                grid=(_ceil_div(bc, tile_rows),),
                in_specs=[
                    pl.BlockSpec((tile_rows, hw), lambda i: (i, 0)),
                    pl.BlockSpec((tile_rows, hw), lambda i: (i, 0)),
                ],
                out_specs=pl.BlockSpec((tile_rows, hw), lambda i: (i, 0)),
            ),
            compiler_params=pltpu.CompilerParams(
                dimension_semantics=("parallel",),
                vmem_limit_bytes=int(vmem_limit),
            ),
            cost_estimate=pl.CostEstimate(
                flops=int(10 * bc * hw),
                transcendentals=int(2 * bc),
                bytes_accessed=int(3 * bc * hw * itemsize),
            ),
        )(g2d, l2d)
        return out2d.reshape(B, C, H, W)

    # ---- split path: stats pass + apply pass, tiled along H*W ---------------
    tile_rows = bc if bc <= sublane else sublane
    if hw <= 128:
        tile_hw = hw
    else:
        bytes_per_elem = 4 * itemsize + 12   # 2 streams x 2 buffers + f32 temps
        tile_hw = budget // max(1, tile_rows * bytes_per_elem)
        tile_hw = max(128, (tile_hw // 128) * 128)
        tile_hw = min(tile_hw, max(128, (hw // 128) * 128))
    hw_steps = _ceil_div(hw, tile_hw)
    row_steps = _ceil_div(bc, tile_rows)

    stats_pipelined = 4 * tile_rows * tile_hw * itemsize
    stats_temps = 3 * tile_rows * tile_hw * 4
    stats_vmem = min(max(32 << 20, stats_pipelined + stats_temps + (4 << 20)),
                     vmem_hard_cap)

    scale2d, bias2d = pl.pallas_call(
        functools.partial(_afi_stats_kernel, hw=hw, tile_hw=tile_hw,
                          inv_n=inv_n, inv_nm1=inv_nm1),
        out_shape=(jax.ShapeDtypeStruct((bc, 1), jnp.float32),
                   jax.ShapeDtypeStruct((bc, 1), jnp.float32)),
        grid_spec=pltpu.PrefetchScalarGridSpec(
            num_scalar_prefetch=0,
            grid=(row_steps, hw_steps),
            in_specs=[
                pl.BlockSpec((tile_rows, tile_hw), lambda i, j: (i, j)),
                pl.BlockSpec((tile_rows, tile_hw), lambda i, j: (i, j)),
            ],
            out_specs=[
                pl.BlockSpec((tile_rows, 1), lambda i, j: (i, 0)),
                pl.BlockSpec((tile_rows, 1), lambda i, j: (i, 0)),
            ],
            scratch_shapes=[pltpu.VMEM((tile_rows, 1), jnp.float32)] * 4,
        ),
        compiler_params=pltpu.CompilerParams(
            dimension_semantics=("parallel", "arbitrary"),
            vmem_limit_bytes=int(stats_vmem),
        ),
        cost_estimate=pl.CostEstimate(
            flops=int(8 * bc * hw),
            transcendentals=int(2 * bc),
            bytes_accessed=int(2 * bc * hw * itemsize),
        ),
    )(g2d, l2d)

    apply_pipelined = 4 * tile_rows * tile_hw * itemsize
    apply_temps = tile_rows * tile_hw * 4
    apply_vmem = min(max(32 << 20, apply_pipelined + apply_temps + (4 << 20)),
                     vmem_hard_cap)

    out2d = pl.pallas_call(
        _afi_apply_kernel,
        out_shape=jax.ShapeDtypeStruct((bc, hw), out_dtype),
        grid_spec=pltpu.PrefetchScalarGridSpec(
            num_scalar_prefetch=0,
            grid=(row_steps, hw_steps),
            in_specs=[
                pl.BlockSpec((tile_rows, 1), lambda i, j: (i, 0)),
                pl.BlockSpec((tile_rows, 1), lambda i, j: (i, 0)),
                pl.BlockSpec((tile_rows, tile_hw), lambda i, j: (i, j)),
            ],
            out_specs=pl.BlockSpec((tile_rows, tile_hw), lambda i, j: (i, j)),
        ),
        compiler_params=pltpu.CompilerParams(
            dimension_semantics=("parallel", "parallel"),
            vmem_limit_bytes=int(apply_vmem),
        ),
        cost_estimate=pl.CostEstimate(
            flops=int(2 * bc * hw),
            transcendentals=0,
            bytes_accessed=int(2 * bc * hw * itemsize),
        ),
    )(scale2d, bias2d, l2d)
    return out2d.reshape(B, C, H, W)


def _reference(global_features, local_features):
    """Pure-JAX reference mirroring the PyTorch module (torch.std is unbiased)."""
    B, C, H, W = global_features.shape
    hw = H * W

    def stats(x):
        xr = x.reshape(B, C, hw).astype(jnp.float32)
        m = jnp.mean(xr, axis=2).reshape(B, C, 1, 1)
        s = jnp.std(xr, axis=2, ddof=1).reshape(B, C, 1, 1) + 1e-6
        return m, s

    gm, gs = stats(global_features)
    lm, ls = stats(local_features)
    return gs * (local_features.astype(jnp.float32) - lm) / ls + gm


if __name__ == "__main__":
    key = jax.random.PRNGKey(0)
    k_g, k_l = jax.random.split(key)

    # Test 1: fused single-kernel path (typical conv feature-map shape).
    B, C, H, W = 2, 4, 16, 16
    global_features = jax.random.normal(k_g, (B, C, H, W), dtype=jnp.float32) * 2.0 + 0.5
    local_features = jax.random.normal(k_l, (B, C, H, W), dtype=jnp.float32) * 0.7 - 0.3
    out = jax.block_until_ready(adaptive_feature_integration(global_features, local_features))
    ref = _reference(global_features, local_features)
    assert out.shape == (B, C, H, W)
    assert jnp.allclose(out, ref.astype(out.dtype), atol=1e-4, rtol=1e-4), "fused path mismatch"

    # Test 2: split (stats + apply) path, forced via a tiny VMEM budget, with a
    # non-multiple-of-128 spatial size to exercise the ragged H*W block.
    B2, C2, H2, W2 = 1, 3, 20, 20
    g2 = jax.random.normal(jax.random.PRNGKey(1), (B2, C2, H2, W2), jnp.float32) * 1.5 + 1.0
    l2 = jax.random.normal(jax.random.PRNGKey(2), (B2, C2, H2, W2), jnp.float32) * 0.5 - 0.2
    out2 = jax.block_until_ready(
        adaptive_feature_integration(g2, l2, _vmem_budget_override=16 << 10))
    ref2 = _reference(g2, l2)
    assert out2.shape == (B2, C2, H2, W2)
    assert jnp.allclose(out2, ref2.astype(out2.dtype), atol=1e-4, rtol=1e-4), "split path mismatch"

    print("KERNEL_OK")
</pallas_src>

<mosaic_0001>
module attributes {stable_mosaic.version = 11 : i64} {
  func.func @_afi_fused_kernel(%arg0: i32, %arg1: memref<8x256xf32, #tpu.memory_space<vmem>>, %arg2: memref<8x256xf32, #tpu.memory_space<vmem>>, %arg3: memref<8x256xf32, #tpu.memory_space<vmem>>) attributes {dimension_semantics = [#tpu.dimension_semantics<parallel>], iteration_bounds = array<i64: 1>, scalar_prefetch = 0 : i64, scratch_operands = 0 : i64, tpu.core_type = #tpu.core_type<tc>, window_params = [{transform_indices = @transform_0, window_bounds = array<i64: 8, 256>}, {transform_indices = @transform_1, window_bounds = array<i64: 8, 256>}, {transform_indices = @transform_2, window_bounds = array<i64: 8, 256>}]} {
    %c0 = arith.constant 0 : index
    %c0_0 = arith.constant 0 : index
    %0 = vector.load %arg1[%c0, %c0_0] : memref<8x256xf32, #tpu.memory_space<vmem>>, vector<8x256xf32>
    %c0_1 = arith.constant 0 : index
    %c0_2 = arith.constant 0 : index
    %1 = vector.load %arg2[%c0_1, %c0_2] : memref<8x256xf32, #tpu.memory_space<vmem>>, vector<8x256xf32>
    %cst = arith.constant dense<0.000000e+00> : vector<8xf32>
    %2 = vector.multi_reduction <add>, %0, %cst [1] : vector<8x256xf32> to vector<8xf32>
    %3 = vector.shape_cast %2 : vector<8xf32> to vector<8x1xf32>
    %cst_3 = arith.constant 3.906250e-03 : f32
    %4 = vector.broadcast %cst_3 : f32 to vector<8x1xf32>
    %5 = arith.mulf %3, %4 : vector<8x1xf32>
    %6 = vector.broadcast %5 : vector<8x1xf32> to vector<8x256xf32>
    %7 = arith.subf %0, %6 : vector<8x256xf32>
    %8 = arith.mulf %7, %7 : vector<8x256xf32>
    %cst_4 = arith.constant dense<0.000000e+00> : vector<8xf32>
    %9 = vector.multi_reduction <add>, %8, %cst_4 [1] : vector<8x256xf32> to vector<8xf32>
    %10 = vector.shape_cast %9 : vector<8xf32> to vector<8x1xf32>
    %cst_5 = arith.constant 0.00392156886 : f32
    %11 = vector.broadcast %cst_5 : f32 to vector<8x1xf32>
    %12 = arith.mulf %10, %11 : vector<8x1xf32>
    %13 = math.sqrt %12 : vector<8x1xf32>
    %cst_6 = arith.constant 9.99999997E-7 : f32
    %14 = vector.broadcast %cst_6 : f32 to vector<8x1xf32>
    %15 = arith.addf %13, %14 : vector<8x1xf32>
    %cst_7 = arith.constant dense<0.000000e+00> : vector<8xf32>
    %16 = vector.multi_reduction <add>, %1, %cst_7 [1] : vector<8x256xf32> to vector<8xf32>
    %17 = vector.shape_cast %16 : vector<8xf32> to vector<8x1xf32>
    %cst_8 = arith.constant 3.906250e-03 : f32
    %18 = vector.broadcast %cst_8 : f32 to vector<8x1xf32>
    %19 = arith.mulf %17, %18 : vector<8x1xf32>
    %20 = vector.broadcast %19 : vector<8x1xf32> to vector<8x256xf32>
    %21 = arith.subf %1, %20 : vector<8x256xf32>
    %22 = arith.mulf %21, %21 : vector<8x256xf32>
    %cst_9 = arith.constant dense<0.000000e+00> : vector<8xf32>
    %23 = vector.multi_reduction <add>, %22, %cst_9 [1] : vector<8x256xf32> to vector<8xf32>
    %24 = vector.shape_cast %23 : vector<8xf32> to vector<8x1xf32>
    %cst_10 = arith.constant 0.00392156886 : f32
    %25 = vector.broadcast %cst_10 : f32 to vector<8x1xf32>
    %26 = arith.mulf %24, %25 : vector<8x1xf32>
    %27 = math.sqrt %26 : vector<8x1xf32>
    %cst_11 = arith.constant 9.99999997E-7 : f32
    %28 = vector.broadcast %cst_11 : f32 to vector<8x1xf32>
    %29 = arith.addf %27, %28 : vector<8x1xf32>
    %30 = arith.divf %15, %29 : vector<8x1xf32>
    %31 = arith.mulf %19, %30 : vector<8x1xf32>
    %32 = arith.subf %5, %31 : vector<8x1xf32>
    %33 = vector.broadcast %30 : vector<8x1xf32> to vector<8x256xf32>
    %34 = arith.mulf %1, %33 : vector<8x256xf32>
    %35 = vector.broadcast %32 : vector<8x1xf32> to vector<8x256xf32>
    %36 = arith.addf %34, %35 : vector<8x256xf32>
    %c0_12 = arith.constant 0 : index
    %c0_13 = arith.constant 0 : index
    %37 = vector.load %arg3[%c0_12, %c0_13] : memref<8x256xf32, #tpu.memory_space<vmem>>, vector<8x256xf32>
    tpu.vector_store %arg3[%c0_12, %c0_13], %36 {strides = array<i32>} : memref<8x256xf32, #tpu.memory_space<vmem>>, vector<8x256xf32>,
    return
  }
  func.func @transform_0(%arg0: i32) -> (i32, i32) {
    %c0_i32 = arith.constant 0 : i32
    %c0_i32_0 = arith.constant 0 : i32
    return %arg0, %c0_i32 : i32, i32
  }
  func.func @transform_1(%arg0: i32) -> (i32, i32) {
    %c0_i32 = arith.constant 0 : i32
    %c0_i32_0 = arith.constant 0 : i32
    return %arg0, %c0_i32 : i32, i32
  }
  func.func @transform_2(%arg0: i32) -> (i32, i32) {
    %c0_i32 = arith.constant 0 : i32
    %c0_i32_0 = arith.constant 0 : i32
    return %arg0, %c0_i32 : i32, i32
  }
}

</mosaic_0001>

<llo_original>
// kernel: tpu_custom_call.1
$region0: #{tpu_custom_call.1}
  #allocation0 [shape = 'u32[]', space=smem, size = 0x4, offset = 0x4, fixed_abs, tag = 'smem constant byte address 0x4 - core index']
  #allocation1 [shape = 'u32[72,128]{1,0:T(1,128)}', space=vmem, size = 0x9000, scoped, tag = 'internal scratch']
  %s0 = inlined_call_operand.hbm [shape: f32[8,256], index: 0, kind: input, shape index: {}]
  %s1 = inlined_call_operand.hbm [shape: f32[8,256], index: 1, kind: input, shape index: {}]
  %s2 = inlined_call_operand.hbm [shape: f32[8,256], index: 2, kind: output, shape index: {}]
  %s3 = sld [smem:[#allocation0]]
  $region26: #{tpu_custom_call.1} parent=0
    _
  %s5 = ssub.s32 1, %s3
  %s6 = scalar_select 0, %s5, %s3
  $region1: #{tpu_custom_call.1} parent=0
    #allocation2 [shape = 'u8[8192]{0}', space=vmem, size = 0x2000, scoped, tag = 'input window, operand 0, single buffered']
    #allocation3 [shape = 's32[1]{0}', space=sflag, size = 0x4, scoped, tag = 'scoped memory for tpu_custom_call.1']
    #allocation4 [shape = 's32[1]{0}', space=sflag, size = 0x4, scoped, tag = 'scoped memory for tpu_custom_call.1']
    #allocation5 [shape = 'u8[8192]{0}', space=vmem, size = 0x2000, scoped, tag = 'input window, operand 1, single buffered']
    #allocation6 [shape = 's32[1]{0}', space=sflag, size = 0x4, scoped, tag = 'scoped memory for tpu_custom_call.1']
    #allocation7 [shape = 'u8[8192]{0}', space=vmem, size = 0x2000, scoped, tag = 'output window, operand 0, single buffered']
    %7 = vsyncpa [#allocation3], 0
    %8 = vsyncpa [#allocation6], 0
    %9 = vsyncpa [#allocation4], 0
    // Predicated region
    $region2: #{tpu_custom_call.1} parent=1 // pred_check
      _
    $region3: #{tpu_custom_call.1} parent=1 // pred_check_branch
      %11 = sbr.rel (0) target = $region5
    $region4: #{tpu_custom_call.1} parent=1 // pred_region
      %13 = vsyncadd [#allocation3], 0
      %s15 = sshll.u32 %s0, 4
      %s16 = int_to_ptr.hbm [resolvable:$true] %s15
      %s17 = sshll.u32 [#allocation2], 4
      %s18 = int_to_ptr.vmem [resolvable:$true] %s17
      %20 = dma.hbm_to_vmem [thread:$0]  %s16, 256, %s18, [#allocation3]
    $region5: #{tpu_custom_call.1} parent=1 // pred_fallthru
      _
    // Predicated region
    $region6: #{tpu_custom_call.1} parent=1 // pred_check
      _
    $region7: #{tpu_custom_call.1} parent=1 // pred_check_branch
      %22 = sbr.rel (0) target = $region9
    $region8: #{tpu_custom_call.1} parent=1 // pred_region
      %24 = vsyncadd [#allocation6], 0
      %s26 = sshll.u32 %s1, 4
      %s27 = int_to_ptr.hbm [resolvable:$true] %s26
      %s28 = sshll.u32 [#allocation5], 4
      %s29 = int_to_ptr.vmem [resolvable:$true] %s28
      %31 = dma.hbm_to_vmem [thread:$0]  %s27, 256, %s29, [#allocation6]
    $region9: #{tpu_custom_call.1} parent=1 // pred_fallthru
      _
    // Predicated region
    $region10: #{tpu_custom_call.1} parent=1 // pred_check
      _
    $region11: #{tpu_custom_call.1} parent=1 // pred_check_branch
      %33 = sbr.rel (0) target = $region13
    $region12: #{tpu_custom_call.1} parent=1 // pred_region
      %35 = dma.done [#allocation3], 256
    $region13: #{tpu_custom_call.1} parent=1 // pred_fallthru
      _
    // Predicated region
    $region14: #{tpu_custom_call.1} parent=1 // pred_check
      _
    $region15: #{tpu_custom_call.1} parent=1 // pred_check_branch
      %37 = sbr.rel (0) target = $region17
    $region16: #{tpu_custom_call.1} parent=1 // pred_region
      %39 = dma.done [#allocation6], 256
    $region17: #{tpu_custom_call.1} parent=1 // pred_fallthru
      _
    %v40 = vld [vmem:[#allocation2] sm:$0xff]
    %v41 = vld [vmem:[#allocation2 + $0x8] sm:$0xff]
    %v42 = vld [vmem:[#allocation5] sm:$0xff]
    %v43 = vld [vmem:[#allocation5 + $0x8] sm:$0xff]
    %v44 = vadd.f32 %v40, %v41
    %45 = vadd.xlane.f32.xlu0 %v44
    %v46 = vpop.xlane.xlu0 %45
    %v47 = vmul.f32 %v46, 0.00390625
    %v48 = vsub.f32 %v40, %v47
    %v49 = vsub.f32 %v41, %v47
    %v50 = vmul.f32 %v48, %v48
    %v51 = vmul.f32 %v49, %v49
    %v52 = vadd.f32 %v50, %v51
    %53 = vadd.xlane.f32.xlu0 %v52
    %v54 = vpop.xlane.xlu0 %53
    %v55 = vmul.f32 %v54, 0.003921569
    %v56 = vrsqrt.pop %v55
    %v57 = vmul.f32 %v56, %v55
    %v58 = vmul.f32 %v57, %v56
    %v59 = vmul.f32 0.5, %v58
    %v60 = vsub.f32 1.5, %v59
    %v61 = vmul.f32 %v56, %v60
    %v62 = vmul.f32 %v55, %v61
    %vm63 = vcmp.eq.f32.partialorder %v55, inf
    %v64 = vsel %vm63, %v55, %v62
    %vm65 = vcmp.eq.f32.partialorder %v55, 0.0
    %v66 = vand.u32 %v55, 2147483648
    %v67 = vsel %vm65, %v66, %v64
    %v68 = vadd.f32 %v67, 1e-06
    %v69 = vadd.f32 %v42, %v43
    %70 = vadd.xlane.f32.xlu0 %v69
    %v71 = vpop.xlane.xlu0 %70
    %v72 = vmul.f32 %v71, 0.00390625
    %v73 = vsub.f32 %v42, %v72
    %v74 = vsub.f32 %v43, %v72
    %v75 = vmul.f32 %v73, %v73
    %v76 = vmul.f32 %v74, %v74
    %v77 = vadd.f32 %v75, %v76
    %78 = vadd.xlane.f32.xlu0 %v77
    %v79 = vpop.xlane.xlu0 %78
    %v80 = vmul.f32 %v79, 0.003921569
    %v81 = vrsqrt.pop %v80
    %v82 = vmul.f32 %v81, %v80
    %v83 = vmul.f32 %v82, %v81
    %v84 = vmul.f32 0.5, %v83
    %v85 = vsub.f32 1.5, %v84
    %v86 = vmul.f32 %v81, %v85
    %v87 = vmul.f32 %v80, %v86
    %vm88 = vcmp.eq.f32.partialorder %v80, inf
    %v89 = vsel %vm88, %v80, %v87
    %vm90 = vcmp.eq.f32.partialorder %v80, 0.0
    %v91 = vand.u32 %v80, 2147483648
    %v92 = vsel %vm90, %v91, %v89
    %v93 = vadd.f32 %v92, 1e-06
    %v94 = vrcp.pop %v93
    %v95 = vmul.f32 %v93, %v94
    %v96 = vsub.f32 1.0, %v95
    %v97 = vmul.f32 %v94, %v96
    %v98 = vadd.f32 %v94, %v97
    %vm99 = vweird.f32 %v93
    %vm100 = vweird.f32 %v94
    %vm101 = vmor %vm99, %vm100
    %v102 = vsel %vm101, %v94, %v98
    %v103 = vand.u32 2147483647, %v93
    %vm104 = vcmp.eq.f32.partialorder %v103, 8.507059e+37
    %v105 = vand.u32 %v93, 2147483648
    %v106 = vor.u32 1.1754944e-38, %v105
    %v107 = vsel %vm104, %v106, %v102
    %v108 = vmul.f32 %v68, %v107
    %v109 = vmul.f32 %v72, %v108
    %v110 = vsub.f32 %v47, %v109
    %v111 = vmul.f32 %v42, %v108
    %v112 = vmul.f32 %v43, %v108
    %v113 = vadd.f32 %v111, %v110
    %v114 = vadd.f32 %v112, %v110
    %115 = vst [vmem:[#allocation7] sm:$0xff] %v113
    %116 = vst [vmem:[#allocation7 + $0x8] sm:$0xff] %v114
    // Predicated region
    $region18: #{tpu_custom_call.1} parent=1 // pred_check
      _
    $region19: #{tpu_custom_call.1} parent=1 // pred_check_branch
      %118 = sbr.rel (0) target = $region21
    $region20: #{tpu_custom_call.1} parent=1 // pred_region
      %120 = vsyncadd [#allocation4], 0
      %s122 = sshll.u32 [#allocation7], 4
      %s123 = int_to_ptr.vmem [resolvable:$true] %s122
      %s124 = sshll.u32 %s2, 4
      %s125 = int_to_ptr.hbm [resolvable:$true] %s124
      %127 = dma.vmem_to_hbm [thread:$0]  %s123, 256, %s125, [#allocation4]
    $region21: #{tpu_custom_call.1} parent=1 // pred_fallthru
      _
    // Predicated region
    $region22: #{tpu_custom_call.1} parent=1 // pred_check
      _
    $region23: #{tpu_custom_call.1} parent=1 // pred_check_branch
      %129 = sbr.rel (0) target = $region25
    $region24: #{tpu_custom_call.1} parent=1 // pred_region
      %131 = dma.done [#allocation4], 256
    $region25: #{tpu_custom_call.1} parent=1 // pred_fallthru
      _
    %132 = vsyncpa [#allocation3], 1
    %133 = vsyncpa [#allocation6], 1
    %134 = vsyncpa [#allocation4], 1

</llo_original>
